<compile_context>
chip_gen: v7x
topology: tpu7x:2x2x1
jax: 0.10.0
libtpu: 0.0.40
codegen_flags: <defaults>
</compile_context>

<pallas_src>
import functools

import jax
import jax.numpy as jnp
from jax.experimental import pallas as pl
from jax.experimental.pallas import tpu as pltpu


# ----------------------------------------------------------------------------
# Parameter setup (glue, one-time): symmetric 8-bit group-wise quantization of
# the PyTorch-style (N_out, K_in) weight, stored K-major for the TPU kernel.
# ----------------------------------------------------------------------------
def compress_weight_sym8(w: jax.Array, group_size: int):
    """w: (N, K) f32 -> (wq_t (K, N) int8, inv_scale_t (K//group_size, N) f32)."""
    n_out, k_in = w.shape
    assert k_in % group_size == 0, "K must be divisible by group_size"
    num_groups = k_in // group_size
    B = 2 ** (8 - 1) - 1  # 127

    grouped = w.reshape(n_out, num_groups, group_size)
    max_abs = jnp.max(jnp.abs(grouped), axis=2, keepdims=True)     # (N, G, 1)
    max_abs = jnp.maximum(max_abs, 1e-8)   # guard all-zero groups (div-by-zero)
    scale = B / max_abs
    q = jnp.round(jnp.clip(grouped * scale, -B, B)).astype(jnp.int8)
    inv_scale = (1.0 / scale).astype(jnp.float32)                  # (N, G, 1)

    wq_t = q.reshape(n_out, k_in).T                                # (K, N) int8
    inv_scale_t = inv_scale[:, :, 0].T                             # (G, N) f32
    return jnp.asarray(wq_t), jnp.asarray(inv_scale_t)


# ----------------------------------------------------------------------------
# Pallas kernel
# ----------------------------------------------------------------------------
def _clinear_kernel(x_ref, wq_ref, inv_ref, b_ref, o_ref, w_bf16_scratch,
                    *, group_size):
    # Grid = (N tiles [slow, "parallel"], M tiles [fast, "arbitrary"]).
    # The int8 weight tile + per-group scales only change with program_id(0),
    # so dequantize them once per column tile into the bf16 VMEM scratch.
    @pl.when(pl.program_id(1) == 0)
    def _dequantize_weight_tile():
        num_groups = wq_ref.shape[0] // group_size
        # Static (unrolled) loop over K-groups: each group is a sublane-aligned
        # (group_size, tn) slab scaled by one sublane-broadcast row of inv_scale.
        for g in range(num_groups):
            sl = pl.ds(g * group_size, group_size)
            w_g = wq_ref[sl, :].astype(jnp.float32) * inv_ref[g:g + 1, :]
            w_bf16_scratch[sl, :] = w_g.astype(jnp.bfloat16)

    # bf16 MXU matmul with f32 accumulation: (tm, K) @ (K, tn).
    acc = jnp.dot(x_ref[...], w_bf16_scratch[...],
                  preferred_element_type=jnp.float32)
    o_ref[...] = (acc + b_ref[...]).astype(o_ref.dtype)


@functools.partial(jax.jit, static_argnames=("group_size", "tm", "tn"))
def clinear_forward(x, wq_t, inv_scale_t, bias, *, group_size, tm=128, tn=256):
    """x: (..., K); wq_t: (K, N) int8; inv_scale_t: (K//gs, N) f32; bias: (N,) or None."""
    orig_shape = x.shape
    k_in, n_out = wq_t.shape
    assert orig_shape[-1] == k_in
    assert k_in % group_size == 0 and group_size % 8 == 0
    assert tm % 8 == 0 and tn % 128 == 0
    assert n_out % tn == 0, "out_features must be a multiple of tn (128-aligned)"

    # Activations go to the MXU in bf16.
    x2d = x.reshape(-1, k_in).astype(jnp.bfloat16)
    m = x2d.shape[0]
    m_pad = pl.cdiv(m, tm) * tm
    if m_pad != m:
        x2d = jnp.pad(x2d, ((0, m_pad - m), (0, 0)))

    if bias is None:
        bias = jnp.zeros((n_out,), dtype=jnp.float32)
    bias2d = bias.reshape(1, n_out).astype(jnp.float32)

    kernel = functools.partial(_clinear_kernel, group_size=group_size)
    out2d = pl.pallas_call(
        kernel,
        out_shape=jax.ShapeDtypeStruct((m_pad, n_out), x.dtype),
        grid_spec=pltpu.PrefetchScalarGridSpec(
            num_scalar_prefetch=0,
            grid=(n_out // tn, m_pad // tm),   # weight tile slow, M tile fast
            in_specs=[
                pl.BlockSpec((tm, k_in), lambda j, i: (i, 0)),                # x (bf16)
                pl.BlockSpec((k_in, tn), lambda j, i: (0, j)),                # weight (int8)
                pl.BlockSpec((k_in // group_size, tn), lambda j, i: (0, j)),  # group scales
                pl.BlockSpec((1, tn), lambda j, i: (0, j)),                   # bias
            ],
            out_specs=pl.BlockSpec((tm, tn), lambda j, i: (i, j)),
            scratch_shapes=[pltpu.VMEM((k_in, tn), jnp.bfloat16)],
        ),
        compiler_params=pltpu.CompilerParams(
            # N axis independent (lets v7x shard across its 2 TensorCores);
            # M axis must stay sequential so the dequantized scratch written at
            # the first M step is reused by the following ones.
            dimension_semantics=("parallel", "arbitrary"),
        ),
    )(x2d, wq_t, inv_scale_t, bias2d)

    if m_pad != m:
        out2d = out2d[:m]
    return out2d.reshape(orig_shape[:-1] + (n_out,))


# ----------------------------------------------------------------------------
# Demo / self-check
# ----------------------------------------------------------------------------
if __name__ == "__main__":
    # Small, module-consistent shapes: batch=2, seq=8, in=256, out=512, group=128.
    batch, seq = 2, 8
    K, N = 256, 512
    group_size = 128

    key = jax.random.PRNGKey(0)
    kx, kw, kb = jax.random.split(key, 3)
    x = jax.random.normal(kx, (batch, seq, K), dtype=jnp.float32)
    w = jax.random.normal(kw, (N, K), dtype=jnp.float32) * 0.05
    bias = jax.random.normal(kb, (N,), dtype=jnp.float32) * 0.1

    # "CLinear.__init__": compress the weight once (plain-JAX glue).
    wq_t, inv_scale_t = compress_weight_sym8(w, group_size)

    # References.
    w_deq = wq_t.astype(jnp.float32) * jnp.repeat(inv_scale_t, group_size, axis=0)  # (K, N)
    x2d = x.reshape(-1, K)
    ref_full = x2d @ w_deq + bias                                    # decompress + F.linear (f32)
    ref_bf16 = (x2d.astype(jnp.bfloat16).astype(jnp.float32)
                @ w_deq.astype(jnp.bfloat16).astype(jnp.float32)) + bias  # mirrors kernel precision

    # "CLinear.forward" with default (performance) tiles: tm=128, tn=256.
    out = clinear_forward(x, wq_t, inv_scale_t, bias, group_size=group_size)
    out = jax.block_until_ready(out)
    assert out.shape == (batch, seq, N)
    out2d = out.reshape(-1, N)
    assert jnp.allclose(out2d, ref_bf16, atol=2e-3, rtol=2e-3), "bf16-mirror mismatch"
    assert float(jnp.max(jnp.abs(out2d - ref_full))) < 1e-1, "full-precision mismatch"

    # Second config with small tiles to exercise the multi-step inner M loop
    # (weight-tile DMA reuse + one-time dequant across several M tiles).
    out_small = clinear_forward(x, wq_t, inv_scale_t, bias,
                                group_size=group_size, tm=8, tn=128)
    out_small = jax.block_until_ready(out_small)
    assert jnp.allclose(out_small.reshape(-1, N), ref_bf16, atol=2e-3, rtol=2e-3)

    print("KERNEL_OK")
</pallas_src>

<mosaic_0001>
module attributes {stable_mosaic.version = 11 : i64} {
  func.func @_clinear_kernel(%arg0: i32, %arg1: i32, %arg2: memref<128x256xbf16, #tpu.memory_space<vmem>>, %arg3: memref<256x256xi8, #tpu.memory_space<vmem>>, %arg4: memref<2x256xf32, #tpu.memory_space<vmem>>, %arg5: memref<1x256xf32, #tpu.memory_space<vmem>>, %arg6: memref<128x256xf32, #tpu.memory_space<vmem>>, %arg7: memref<256x256xbf16, #tpu.memory_space<vmem>>) attributes {dimension_semantics = [#tpu.dimension_semantics<parallel>, #tpu.dimension_semantics<arbitrary>], iteration_bounds = array<i64: 2, 1>, scalar_prefetch = 0 : i64, scratch_operands = 1 : i64, tpu.core_type = #tpu.core_type<tc>, window_params = [{transform_indices = @transform_0, window_bounds = array<i64: 128, 256>}, {transform_indices = @transform_1, window_bounds = array<i64: 256, 256>}, {transform_indices = @transform_2, window_bounds = array<i64: 2, 256>}, {transform_indices = @transform_3, window_bounds = array<i64: 1, 256>}, {transform_indices = @transform_4, window_bounds = array<i64: 128, 256>}]} {
    %c0_i32 = arith.constant 0 : i32
    %0 = arith.cmpi eq, %arg1, %c0_i32 : i32
    %1 = arith.extui %0 : i1 to i32
    %c0_i32_0 = arith.constant 0 : i32
    %2 = arith.cmpi ne, %1, %c0_i32_0 : i32
    scf.if %2 {
      %c0_8 = arith.constant 0 : index
      %c0_9 = arith.constant 0 : index
      %10 = vector.load %arg3[%c0_8, %c0_9] : memref<256x256xi8, #tpu.memory_space<vmem>>, vector<128x256xi8>
      %11 = arith.sitofp %10 : vector<128x256xi8> to vector<128x256xf32>
      %c0_10 = arith.constant 0 : index
      %c0_11 = arith.constant 0 : index
      %12 = vector.load %arg4[%c0_10, %c0_11] : memref<2x256xf32, #tpu.memory_space<vmem>>, vector<1x256xf32>
      %13 = vector.broadcast %12 : vector<1x256xf32> to vector<128x256xf32>
      %14 = arith.mulf %11, %13 : vector<128x256xf32>
      %15 = arith.truncf %14 : vector<128x256xf32> to vector<128x256xbf16>
      %c0_12 = arith.constant 0 : index
      %c0_13 = arith.constant 0 : index
      %16 = vector.load %arg7[%c0_12, %c0_13] : memref<256x256xbf16, #tpu.memory_space<vmem>>, vector<128x256xbf16>
      tpu.vector_store %arg7[%c0_12, %c0_13], %15 {strides = array<i32>} : memref<256x256xbf16, #tpu.memory_space<vmem>>, vector<128x256xbf16>,
      %c128 = arith.constant 128 : index
      %c0_14 = arith.constant 0 : index
      %17 = vector.load %arg3[%c128, %c0_14] : memref<256x256xi8, #tpu.memory_space<vmem>>, vector<128x256xi8>
      %18 = arith.sitofp %17 : vector<128x256xi8> to vector<128x256xf32>
      %c1 = arith.constant 1 : index
      %c0_15 = arith.constant 0 : index
      %19 = vector.load %arg4[%c1, %c0_15] : memref<2x256xf32, #tpu.memory_space<vmem>>, vector<1x256xf32>
      %20 = vector.broadcast %19 : vector<1x256xf32> to vector<128x256xf32>
      %21 = arith.mulf %18, %20 : vector<128x256xf32>
      %22 = arith.truncf %21 : vector<128x256xf32> to vector<128x256xbf16>
      %c128_16 = arith.constant 128 : index
      %c0_17 = arith.constant 0 : index
      %23 = vector.load %arg7[%c128_16, %c0_17] : memref<256x256xbf16, #tpu.memory_space<vmem>>, vector<128x256xbf16>
      tpu.vector_store %arg7[%c128_16, %c0_17], %22 {strides = array<i32>} : memref<256x256xbf16, #tpu.memory_space<vmem>>, vector<128x256xbf16>,
    } else {
    }
    %c0 = arith.constant 0 : index
    %c0_1 = arith.constant 0 : index
    %3 = vector.load %arg2[%c0, %c0_1] : memref<128x256xbf16, #tpu.memory_space<vmem>>, vector<128x256xbf16>
    %c0_2 = arith.constant 0 : index
    %c0_3 = arith.constant 0 : index
    %4 = vector.load %arg7[%c0_2, %c0_3] : memref<256x256xbf16, #tpu.memory_space<vmem>>, vector<256x256xbf16>
    %cst = arith.constant dense<0.000000e+00> : vector<128x256xf32>
    %5 = tpu.matmul %3, %4, %cst {dimension_numbers = #tpu.dot_dimension_numbers<[1], [0], [0], [1], [0, 0, 1, 1], [], []>} : vector<128x256xbf16>, vector<256x256xbf16>, vector<128x256xf32> -> vector<128x256xf32>
    %c0_4 = arith.constant 0 : index
    %c0_5 = arith.constant 0 : index
    %6 = vector.load %arg5[%c0_4, %c0_5] : memref<1x256xf32, #tpu.memory_space<vmem>>, vector<1x256xf32>
    %7 = vector.broadcast %6 : vector<1x256xf32> to vector<128x256xf32>
    %8 = arith.addf %5, %7 : vector<128x256xf32>
    %c0_6 = arith.constant 0 : index
    %c0_7 = arith.constant 0 : index
    %9 = vector.load %arg6[%c0_6, %c0_7] : memref<128x256xf32, #tpu.memory_space<vmem>>, vector<128x256xf32>
    tpu.vector_store %arg6[%c0_6, %c0_7], %8 {strides = array<i32>} : memref<128x256xf32, #tpu.memory_space<vmem>>, vector<128x256xf32>,
    return
  }
  func.func @transform_0(%arg0: i32, %arg1: i32) -> (i32, i32) {
    %c0_i32 = arith.constant 0 : i32
    %c0_i32_0 = arith.constant 0 : i32
    return %arg1, %c0_i32 : i32, i32
  }
  func.func @transform_1(%arg0: i32, %arg1: i32) -> (i32, i32) {
    %c0_i32 = arith.constant 0 : i32
    %c0_i32_0 = arith.constant 0 : i32
    return %c0_i32, %arg0 : i32, i32
  }
  func.func @transform_2(%arg0: i32, %arg1: i32) -> (i32, i32) {
    %c0_i32 = arith.constant 0 : i32
    %c0_i32_0 = arith.constant 0 : i32
    return %c0_i32, %arg0 : i32, i32
  }
  func.func @transform_3(%arg0: i32, %arg1: i32) -> (i32, i32) {
    %c0_i32 = arith.constant 0 : i32
    %c0_i32_0 = arith.constant 0 : i32
    return %c0_i32, %arg0 : i32, i32
  }
  func.func @transform_4(%arg0: i32, %arg1: i32) -> (i32, i32) {
    %c0_i32 = arith.constant 0 : i32
    return %arg1, %arg0 : i32, i32
  }
}

</mosaic_0001>

<llo_original>
// kernel: clinear_forward.1
$region0: #{clinear_forward.1}
  #allocation0 [shape = 'u32[]', space=smem, size = 0x4, offset = 0x4, fixed_abs, tag = 'smem constant byte address 0x4 - core index']
  #allocation1 [shape = 'u32[144,128]{1,0:T(1,128)}', space=vmem, size = 0x12000, scoped, tag = 'internal scratch']
  #allocation2 [shape = 'bf16[256,256]{1,0:T(16,128)(2,1)}', space=vmem, size = 0x20000, scoped, tag = 'scratch operand']
  %s0 = inlined_call_operand.vmem [shape: bf16[128,256], index: 0, kind: input, shape index: {}]
  %s1 = inlined_call_operand.hbm [shape: s8[256,512], index: 1, kind: input, shape index: {}]
  %s2 = inlined_call_operand.vmem [shape: f32[2,512], index: 2, kind: input, shape index: {}]
  %s3 = inlined_call_operand.vmem [shape: f32[1,512], index: 3, kind: input, shape index: {}]
  %s4 = inlined_call_operand.vmem [shape: f32[128,512], index: 4, kind: output, shape index: {}]
  %s5 = sld [smem:[#allocation0]]
  $region76: #{clinear_forward.1} parent=0
    _
  %s7 = ssub.s32 1, %s5
  %s8 = scalar_select 0, %s7, %s5
  $region1: #{clinear_forward.1} parent=0
    #allocation3 [shape = 'u8[131072]{0}', space=vmem, size = 0x20000, scoped, tag = 'input window, operand 1']
    #allocation4 [shape = 's32[2]{0}', space=sflag, size = 0x8, scoped, tag = 'scoped memory for clinear_forward.1']
    #allocation5 [shape = 'u8[262144]{0}', space=vmem, size = 0x40000, scoped, tag = 'output window, operand 0']
    %9 = vsyncpa [#allocation4], 0
    %s10 = scalar_lea.sflag [#allocation4], 1
    %11 = vsyncpa %s10, 0
    loop: start=0, step=1, limit=4
    $region2: #{clinear_forward.1} parent=1 // loop_pre_header
      _
    $region3: #{clinear_forward.1} parent=1 // loop_header
      %s13 = sphi 0, %s17
      %p14 = scmp.ge.s32.totalorder %s13, 4
      %s20 = sphi 0, %s32
      %s21 = sphi 0, %s28
      %s22 = sphi 0, %s20
      %s23 = sphi 0, %s21
      %s24 = sphi 0, %s22
      %s25 = sphi 0, %s23
      %s35 = sphi 0, %s37
      %s38 = sphi 0, %s35
      %s39 = sphi 0, %s38
      %s55 = sphi 0, %s39
      %s61 = sphi 0, %s63
      %s64 = sphi 0, %s61
      %s65 = sphi 0, %s64
      %s81 = sphi 0, %s65
      %s87 = sphi 0, %s89
      %s90 = sphi 0, %s87
      %s91 = sphi 0, %s90
      %s107 = sphi 0, %s91
      %s113 = sphi 0, %s115
      %s116 = sphi 0, %s113
      %s117 = sphi 0, %s116
      %s133 = sphi 0, %s117
      %s141 = sphi 0, %s143
      %s144 = sphi 0, %s141
      %s145 = sphi 0, %s144
      %s161 = sphi 0, %s145
    $region4: #{clinear_forward.1} parent=1 // loop_header_branch
      %16 = sbr.rel (%p14) target = $region8
    $region5: #{clinear_forward.1} parent=1 // loop_body
      %s18 = ssub.s32 %s13, 1
      %s19 = ssub.s32 %s13, 2
      %s26 = sadd.s32 1, %s21
      %p27 = scmp.ge.s32.totalorder %s26, 1
      %s28 = scalar_select %p27, 0, %s26
      %s29 = sadd.s32 1, %s20
      %s30 = scalar_select %p27, %s29, %s20
      %p31 = scmp.ge.s32.totalorder %s30, 2
      %s32 = scalar_select %p31, 0, %s30
      %s33 = ssub.s32 %s21, %s28
      %p34 = scmp.eq.s32.totalorder %s33, 0
      %s36 = sadd.s32 %s35, 1
      %s37 = scalar_select %p34, %s35, %s36
      %p40 = pneg %p34
      %p41 = scmp.eq.s32.totalorder %s13, 1
      %p42 = por %p40, %p41
      %p43 = scmp.ne.s32.totalorder %s35, %s38
      %p44 = scmp.eq.s32.totalorder %s13, 0
      %p45 = por %p43, %p44
      %p46 = scmp.ne.s32.totalorder %s35, %s38
      %p47 = scmp.eq.s32.totalorder %s18, 1
      %p48 = por %p46, %p47
      %p49 = scmp.ne.s32.totalorder %s38, %s39
      %p50 = scmp.eq.s32.totalorder %s18, 0
      %p51 = por %p49, %p50
      %p52 = scmp.ne.s32.totalorder %s38, %s39
      %p53 = scmp.eq.s32.totalorder %s19, 1
      %p54 = por %p52, %p53
      %p56 = scmp.ne.s32.totalorder %s39, %s55
      %p57 = scmp.eq.s32.totalorder %s19, 0
      %p58 = por %p56, %p57
      %s59 = ssub.s32 %s20, %s32
      %p60 = scmp.eq.s32.totalorder %s59, 0
      %s62 = sadd.s32 %s61, 1
      %s63 = scalar_select %p60, %s61, %s62
      %p66 = pneg %p60
      %p67 = scmp.eq.s32.totalorder %s13, 1
      %p68 = por %p66, %p67
      %p69 = scmp.ne.s32.totalorder %s61, %s64
      %p70 = scmp.eq.s32.totalorder %s13, 0
      %p71 = por %p69, %p70
      %p72 = scmp.ne.s32.totalorder %s61, %s64
      %p73 = scmp.eq.s32.totalorder %s18, 1
      %p74 = por %p72, %p73
      %p75 = scmp.ne.s32.totalorder %s64, %s65
      %p76 = scmp.eq.s32.totalorder %s18, 0
      %p77 = por %p75, %p76
      %p78 = scmp.ne.s32.totalorder %s64, %s65
      %p79 = scmp.eq.s32.totalorder %s19, 1
      %p80 = por %p78, %p79
      %p82 = scmp.ne.s32.totalorder %s65, %s81
      %p83 = scmp.eq.s32.totalorder %s19, 0
      %p84 = por %p82, %p83
      %s85 = ssub.s32 %s20, %s32
      %p86 = scmp.eq.s32.totalorder %s85, 0
      %s88 = sadd.s32 %s87, 1
      %s89 = scalar_select %p86, %s87, %s88
      %p92 = pneg %p86
      %p93 = scmp.eq.s32.totalorder %s13, 1
      %p94 = por %p92, %p93
      %p95 = scmp.ne.s32.totalorder %s87, %s90
      %p96 = scmp.eq.s32.totalorder %s13, 0
      %p97 = por %p95, %p96
      %p98 = scmp.ne.s32.totalorder %s87, %s90
      %p99 = scmp.eq.s32.totalorder %s18, 1
      %p100 = por %p98, %p99
      %p101 = scmp.ne.s32.totalorder %s90, %s91
      %p102 = scmp.eq.s32.totalorder %s18, 0
      %p103 = por %p101, %p102
      %p104 = scmp.ne.s32.totalorder %s90, %s91
      %p105 = scmp.eq.s32.totalorder %s19, 1
      %p106 = por %p104, %p105
      %p108 = scmp.ne.s32.totalorder %s91, %s107
      %p109 = scmp.eq.s32.totalorder %s19, 0
      %p110 = por %p108, %p109
      %s111 = ssub.s32 %s20, %s32
      %p112 = scmp.eq.s32.totalorder %s111, 0
      %s114 = sadd.s32 %s113, 1
      %s115 = scalar_select %p112, %s113, %s114
      %p118 = pneg %p112
      %p119 = scmp.eq.s32.totalorder %s13, 1
      %p120 = por %p118, %p119
      %p121 = scmp.ne.s32.totalorder %s113, %s116
      %p122 = scmp.eq.s32.totalorder %s13, 0
      %p123 = por %p121, %p122
      %p124 = scmp.ne.s32.totalorder %s113, %s116
      %p125 = scmp.eq.s32.totalorder %s18, 1
      %p126 = por %p124, %p125
      %p127 = scmp.ne.s32.totalorder %s116, %s117
      %p128 = scmp.eq.s32.totalorder %s18, 0
      %p129 = por %p127, %p128
      %p130 = scmp.ne.s32.totalorder %s116, %s117
      %p131 = scmp.eq.s32.totalorder %s19, 1
      %p132 = por %p130, %p131
      %p134 = scmp.ne.s32.totalorder %s117, %s133
      %p135 = scmp.eq.s32.totalorder %s19, 0
      %p136 = por %p134, %p135
      %s137 = ssub.s32 %s21, %s28
      %s138 = ssub.s32 %s20, %s32
      %s139 = sor.u32 %s137, %s138
      %p140 = scmp.eq.s32.totalorder %s139, 0
      %s142 = sadd.s32 %s141, 1
      %s143 = scalar_select %p140, %s141, %s142
      %p146 = pneg %p140
      %p147 = scmp.eq.s32.totalorder %s13, 1
      %p148 = por %p146, %p147
      %p149 = scmp.ne.s32.totalorder %s141, %s144
      %p150 = scmp.eq.s32.totalorder %s13, 0
      %p151 = por %p149, %p150
      %p152 = scmp.ne.s32.totalorder %s141, %s144
      %p153 = scmp.eq.s32.totalorder %s18, 1
      %p154 = por %p152, %p153
      %p155 = scmp.ne.s32.totalorder %s144, %s145
      %p156 = scmp.eq.s32.totalorder %s18, 0
      %p157 = por %p155, %p156
      %p158 = scmp.ne.s32.totalorder %s144, %s145
      %p159 = scmp.eq.s32.totalorder %s19, 1
      %p160 = por %p158, %p159
      %p162 = scmp.ne.s32.totalorder %s145, %s161
      %p163 = scmp.eq.s32.totalorder %s19, 0
      %p164 = por %p162, %p163
      %p165 = scmp.le.s32.totalorder 1, %s13
      %p166 = scmp.lt.s32.totalorder %s13, 3
      %p167 = pnand %p165, %p166
      %p168 = pneg %p167
      // Predicated region
      $region9: #{clinear_forward.1} parent=5 // pred_check
        _
      $region10: #{clinear_forward.1} parent=5 // pred_check_branch
        %170 = sbr.rel (%p167) target = $region12
      $region11: #{clinear_forward.1} parent=5 // pred_region
        %s171 = ssub.s32 %s13, 1
        // Predicated region
        $region13: #{clinear_forward.1} parent=11 // pred_check
          %p172 = pneg %p51
        $region14: #{clinear_forward.1} parent=11 // pred_check_branch
          %174 = sbr.rel (%p172) target = $region16
        $region15: #{clinear_forward.1} parent=11 // pred_region
          %s175 = smul.u32 16, %s23
          %p176 = scmp.lt.s32.totalorder %s175, 15
          %s177 = scalar_select %p176, %s175, 15
          %s178 = smul.addr %s177, 2
          %s179 = smul.addr %s178, 4
          %s180 = scalar_lea.vmem %s0, %s179
          %s181 = smul.u32 16, %s23
        $region16: #{clinear_forward.1} parent=11 // pred_fallthru
          _
      $region12: #{clinear_forward.1} parent=5 // pred_fallthru
        _
      %p182 = scmp.lt.s32.totalorder %s13, 2
      // Predicated region
      $region17: #{clinear_forward.1} parent=5 // pred_check
        %p183 = pneg %p182
      $region18: #{clinear_forward.1} parent=5 // pred_check_branch
        %185 = sbr.rel (%p183) target = $region20
      $region19: #{clinear_forward.1} parent=5 // pred_region
        // Predicated region
        $region21: #{clinear_forward.1} parent=19 // pred_check
          %p186 = pneg %p71
        $region22: #{clinear_forward.1} parent=19 // pred_check_branch
          %188 = sbr.rel (%p186) target = $region24
        $region23: #{clinear_forward.1} parent=19 // pred_region
          %s189 = sand.u32 %s61, 1
          %s190 = scalar_lea.sflag [#allocation4], %s189
          %s191 = sand.u32 %s61, 1
          %s192 = smul.addr %s191, 128
          %s193 = scalar_lea.vmem [#allocation3], %s192
          %s194 = smul.u32 2, %s20
          %s196 = ssub.s32 2048, 2048
          %197 = vsyncadd %s190, %s196
          %s198 = smul.addr %s194, 128
          %s199 = scalar_lea.hbm %s1, %s198
          %s200 = sshll.u32 %s193, 4
          %s201 = int_to_ptr.vmem [resolvable:$true] %s200
          %206 = dma.hbm_to_vmem [thread:$0]  %s199, 2048, %s201, %s190, 512, 256, 16
        $region24: #{clinear_forward.1} parent=19 // pred_fallthru
          _
        // Predicated region
        $region25: #{clinear_forward.1} parent=19 // pred_check
          %p207 = pneg %p97
        $region26: #{clinear_forward.1} parent=19 // pred_check_branch
          %209 = sbr.rel (%p207) target = $region28
        $region27: #{clinear_forward.1} parent=19 // pred_region
          %s210 = smul.u32 2, %s20
          %p211 = scmp.lt.s32.totalorder %s210, 3
          %s212 = scalar_select %p211, %s210, 3
          %s213 = smul.addr %s212, 2
          %s214 = scalar_lea.vmem %s2, %s213
          %s215 = smul.u32 2, %s20
        $region28: #{clinear_forward.1} parent=19 // pred_fallthru
          _
        // Predicated region
        $region29: #{clinear_forward.1} parent=19 // pred_check
          %p216 = pneg %p123
        $region30: #{clinear_forward.1} parent=19 // pred_check_branch
          %218 = sbr.rel (%p216) target = $region32
        $region31: #{clinear_forward.1} parent=19 // pred_region
          %s219 = smul.u32 2, %s20
          %p220 = scmp.lt.s32.totalorder %s219, 3
          %s221 = scalar_select %p220, %s219, 3
          %s222 = scalar_lea.vmem %s3, %s221
          %s223 = smul.u32 2, %s20
        $region32: #{clinear_forward.1} parent=19 // pred_fallthru
          _
      $region20: #{clinear_forward.1} parent=5 // pred_fallthru
        _
      %p224 = scmp.le.s32.totalorder 1, %s13
      %p225 = scmp.lt.s32.totalorder %s13, 3
      %p226 = pnand %p224, %p225
      %p227 = pneg %p226
      // Predicated region
      $region33: #{clinear_forward.1} parent=5 // pred_check
        _
      $region34: #{clinear_forward.1} parent=5 // pred_check_branch
        %229 = sbr.rel (%p226) target = $region36
      $region35: #{clinear_forward.1} parent=5 // pred_region
        %s230 = ssub.s32 %s13, 1
        %s231 = sand.u32 %s64, 1
        %s232 = scalar_lea.sflag [#allocation4], %s231
        %s233 = sand.u32 %s64, 1
        %s234 = smul.addr %s233, 128
        %s235 = scalar_lea.vmem [#allocation3], %s234
        // Predicated region
        $region37: #{clinear_forward.1} parent=35 // pred_check
          %p236 = pneg %p77
        $region38: #{clinear_forward.1} parent=35 // pred_check_branch
          %238 = sbr.rel (%p236) target = $region40
        $region39: #{clinear_forward.1} parent=35 // pred_region
          %239 = dma.done %s232, 2048
        $region40: #{clinear_forward.1} parent=35 // pred_fallthru
          _
        %s240 = smul.u32 16, %s23
        %p241 = scmp.lt.s32.totalorder %s240, 15
        %s242 = scalar_select %p241, %s240, 15
        %s243 = smul.addr %s242, 2
        %s244 = smul.addr %s243, 4
        %s245 = scalar_lea.vmem %s0, %s244
        %p246 = pneg %p51
        %p247 = pneg %p48
        %s248 = sand.u32 %s64, 1
        %s249 = scalar_lea.sflag [#allocation4], %s248
        %s250 = sand.u32 %s64, 1
        %s251 = smul.addr %s250, 128
        %s252 = scalar_lea.vmem [#allocation3], %s251
        %p253 = pneg %p77
        %p254 = pneg %p74
        %s255 = smul.u32 2, %s22
        %p256 = scmp.lt.s32.totalorder %s255, 3
        %s257 = scalar_select %p256, %s255, 3
        %s258 = smul.addr %s257, 2
        %s259 = scalar_lea.vmem %s2, %s258
        %p260 = pneg %p103
        %p261 = pneg %p100
        %s262 = smul.u32 2, %s22
        %p263 = scmp.lt.s32.totalorder %s262, 3
        %s264 = scalar_select %p263, %s262, 3
        %s265 = scalar_lea.vmem %s3, %s264
        %p266 = pneg %p129
        %p267 = pneg %p126
        %p268 = pneg %p157
        %p269 = pneg %p154
        %s270 = sand.u32 %s144, 1
        %s271 = sand.u32 %s144, 1
        %s272 = smul.addr %s271, 256
        %s273 = scalar_lea.vmem [#allocation5], %s272
        %s274 = smul.u32 16, %s23
        %p275 = scmp.lt.s32.totalorder %s274, 15
        %s276 = scalar_select %p275, %s274, 15
        %s277 = smul.addr %s276, 2
        %s278 = smul.addr %s277, 4
        %s279 = scalar_lea.vmem %s0, %s278
        %s280 = smul.u32 16, %s23
        %s281 = smul.u32 2, %s22
        %s282 = smul.u32 2, %s22
        %p283 = scmp.lt.s32.totalorder %s282, 3
        %s284 = scalar_select %p283, %s282, 3
        %s285 = smul.addr %s284, 2
        %s286 = scalar_lea.vmem %s2, %s285
        %s287 = smul.u32 2, %s22
        %s288 = smul.u32 2, %s22
        %p289 = scmp.lt.s32.totalorder %s288, 3
        %s290 = scalar_select %p289, %s288, 3
        %s291 = scalar_lea.vmem %s3, %s290
        %s292 = smul.u32 2, %s22
        %s293 = smul.u32 16, %s23
        %s294 = smul.u32 2, %s22
        %p295 = scmp.eq.s32.totalorder %s23, 0
        // Predicated region
        $region41: #{clinear_forward.1} parent=35 // pred_check
          %p296 = pneg %p295
        $region42: #{clinear_forward.1} parent=35 // pred_check_branch
          %298 = sbr.rel (%p296) target = $region44
        $region43: #{clinear_forward.1} parent=35 // pred_region
          %v299 = vld [vmem:[%s235] sm:$0xff]
          %v300 = vld [vmem:[%s235 + $0x8] sm:$0xff]
          %v301 = vld [vmem:[%s235 + $0x10] sm:$0xff]
          %v302 = vld [vmem:[%s235 + $0x18] sm:$0xff]
          %v303 = vld [vmem:[%s235 + $0x20] sm:$0xff]
          %v304 = vld [vmem:[%s235 + $0x28] sm:$0xff]
          %v305 = vld [vmem:[%s235 + $0x30] sm:$0xff]
          %v306 = vld [vmem:[%s235 + $0x38] sm:$0xff]
          %v307 = vunpack.c.0.s8 %v299
          %v308 = vunpack.c.0.s8 %v300
          %v309 = vunpack.c.1.s8 %v299
          %v310 = vunpack.c.1.s8 %v300
          %v311 = vunpack.c.2.s8 %v299
          %v312 = vunpack.c.2.s8 %v300
          %v313 = vunpack.c.3.s8 %v299
          %v314 = vunpack.c.3.s8 %v300
          %v315 = vunpack.c.0.s8 %v301
          %v316 = vunpack.c.0.s8 %v302
          %v317 = vunpack.c.1.s8 %v301
          %v318 = vunpack.c.1.s8 %v302
          %v319 = vunpack.c.2.s8 %v301
          %v320 = vunpack.c.2.s8 %v302
          %v321 = vunpack.c.3.s8 %v301
          %v322 = vunpack.c.3.s8 %v302
          %v323 = vunpack.c.0.s8 %v303
          %v324 = vunpack.c.0.s8 %v304
          %v325 = vunpack.c.1.s8 %v303
          %v326 = vunpack.c.1.s8 %v304
          %v327 = vunpack.c.2.s8 %v303
          %v328 = vunpack.c.2.s8 %v304
          %v329 = vunpack.c.3.s8 %v303
          %v330 = vunpack.c.3.s8 %v304
          %v331 = vunpack.c.0.s8 %v305
          %v332 = vunpack.c.0.s8 %v306
          %v333 = vunpack.c.1.s8 %v305
          %v334 = vunpack.c.1.s8 %v306
          %v335 = vunpack.c.2.s8 %v305
          %v336 = vunpack.c.2.s8 %v306
          %v337 = vunpack.c.3.s8 %v305
          %v338 = vunpack.c.3.s8 %v306
          %v339 = vcvt.s32.f32 %v307
          %v340 = vcvt.s32.f32 %v308
          %v341 = vcvt.s32.f32 %v309
          %v342 = vcvt.s32.f32 %v310
          %v343 = vcvt.s32.f32 %v311
          %v344 = vcvt.s32.f32 %v312
          %v345 = vcvt.s32.f32 %v313
          %v346 = vcvt.s32.f32 %v314
          %v347 = vcvt.s32.f32 %v315
          %v348 = vcvt.s32.f32 %v316
          %v349 = vcvt.s32.f32 %v317
          %v350 = vcvt.s32.f32 %v318
          %v351 = vcvt.s32.f32 %v319
          %v352 = vcvt.s32.f32 %v320
          %v353 = vcvt.s32.f32 %v321
          %v354 = vcvt.s32.f32 %v322
          %v355 = vcvt.s32.f32 %v323
          %v356 = vcvt.s32.f32 %v324
          %v357 = vcvt.s32.f32 %v325
          %v358 = vcvt.s32.f32 %v326
          %v359 = vcvt.s32.f32 %v327
          %v360 = vcvt.s32.f32 %v328
          %v361 = vcvt.s32.f32 %v329
          %v362 = vcvt.s32.f32 %v330
          %v363 = vcvt.s32.f32 %v331
          %v364 = vcvt.s32.f32 %v332
          %v365 = vcvt.s32.f32 %v333
          %v366 = vcvt.s32.f32 %v334
          %v367 = vcvt.s32.f32 %v335
          %v368 = vcvt.s32.f32 %v336
          %v369 = vcvt.s32.f32 %v337
          %v370 = vcvt.s32.f32 %v338
          %v371 = vld [vmem:[%s286] ss:$2 sm:$0x3]
          %v373 = vlaneseq
          %v374 = vshrl.u32 %v373, 7
          %v375 = vsub.s32 0, %v374
          %v376 = vrot.slane %v371, %v375
          %v377 = vlaneseq
          %v378 = vshrl.u32 %v377, 7
          %v379 = vsub.s32 1, %v378
          %v380 = vrot.slane %v371, %v379
          %v383 = vmul.f32 %v339, %v376
          %v384 = vmul.f32 %v340, %v380
          %v385 = vmul.f32 %v341, %v376
          %v386 = vmul.f32 %v342, %v380
          %v387 = vmul.f32 %v343, %v376
          %v388 = vmul.f32 %v344, %v380
          %v389 = vmul.f32 %v345, %v376
          %v390 = vmul.f32 %v346, %v380
          %v391 = vmul.f32 %v347, %v376
          %v392 = vmul.f32 %v348, %v380
          %v393 = vmul.f32 %v349, %v376
          %v394 = vmul.f32 %v350, %v380
          %v395 = vmul.f32 %v351, %v376
          %v396 = vmul.f32 %v352, %v380
          %v397 = vmul.f32 %v353, %v376
          %v398 = vmul.f32 %v354, %v380
          %v399 = vmul.f32 %v355, %v376
          %v400 = vmul.f32 %v356, %v380
          %v401 = vmul.f32 %v357, %v376
          %v402 = vmul.f32 %v358, %v380
          %v403 = vmul.f32 %v359, %v376
          %v404 = vmul.f32 %v360, %v380
          %v405 = vmul.f32 %v361, %v376
          %v406 = vmul.f32 %v362, %v380
          %v407 = vmul.f32 %v363, %v376
          %v408 = vmul.f32 %v364, %v380
          %v409 = vmul.f32 %v365, %v376
          %v410 = vmul.f32 %v366, %v380
          %v411 = vmul.f32 %v367, %v376
          %v412 = vmul.f32 %v368, %v380
          %v413 = vmul.f32 %v369, %v376
          %v414 = vmul.f32 %v370, %v380
          %v415 = vpack.c.bf16 %v385, %v383
          %v416 = vpack.c.bf16 %v386, %v384
          %v417 = vpack.c.bf16 %v389, %v387
          %v418 = vpack.c.bf16 %v390, %v388
          %v419 = vpack.c.bf16 %v393, %v391
          %v420 = vpack.c.bf16 %v394, %v392
          %v421 = vpack.c.bf16 %v397, %v395
          %v422 = vpack.c.bf16 %v398, %v396
          %v423 = vpack.c.bf16 %v401, %v399
          %v424 = vpack.c.bf16 %v402, %v400
          %v425 = vpack.c.bf16 %v405, %v403
          %v426 = vpack.c.bf16 %v406, %v404
          %v427 = vpack.c.bf16 %v409, %v407
          %v428 = vpack.c.bf16 %v410, %v408
          %v429 = vpack.c.bf16 %v413, %v411
          %v430 = vpack.c.bf16 %v414, %v412
          %431 = vst [vmem:[#allocation2] sm:$0xff] %v415
          %432 = vst [vmem:[#allocation2 + $0x8] sm:$0xff] %v416
          %433 = vst [vmem:[#allocation2 + $0x10] sm:$0xff] %v417
          %434 = vst [vmem:[#allocation2 + $0x18] sm:$0xff] %v418
          %435 = vst [vmem:[#allocation2 + $0x20] sm:$0xff] %v419
          %436 = vst [vmem:[#allocation2 + $0x28] sm:$0xff] %v420
          %437 = vst [vmem:[#allocation2 + $0x30] sm:$0xff] %v421
          %438 = vst [vmem:[#allocation2 + $0x38] sm:$0xff] %v422
          %439 = vst [vmem:[#allocation2 + $0x40] sm:$0xff] %v423
          %440 = vst [vmem:[#allocation2 + $0x48] sm:$0xff] %v424
          %441 = vst [vmem:[#allocation2 + $0x50] sm:$0xff] %v425
          %442 = vst [vmem:[#allocation2 + $0x58] sm:$0xff] %v426
          %443 = vst [vmem:[#allocation2 + $0x60] sm:$0xff] %v427
          %444 = vst [vmem:[#allocation2 + $0x68] sm:$0xff] %v428
          %445 = vst [vmem:[#allocation2 + $0x70] sm:$0xff] %v429
          %446 = vst [vmem:[#allocation2 + $0x78] sm:$0xff] %v430
          %v447 = vld [vmem:[%s235 + $0x40] sm:$0xff]
          %v448 = vld [vmem:[%s235 + $0x48] sm:$0xff]
          %v449 = vld [vmem:[%s235 + $0x50] sm:$0xff]
          %v450 = vld [vmem:[%s235 + $0x58] sm:$0xff]
          %v451 = vld [vmem:[%s235 + $0x60] sm:$0xff]
          %v452 = vld [vmem:[%s235 + $0x68] sm:$0xff]
          %v453 = vld [vmem:[%s235 + $0x70] sm:$0xff]
          %v454 = vld [vmem:[%s235 + $0x78] sm:$0xff]
          %v455 = vunpack.c.0.s8 %v447
          %v456 = vunpack.c.0.s8 %v448
          %v457 = vunpack.c.1.s8 %v447
          %v458 = vunpack.c.1.s8 %v448
          %v459 = vunpack.c.2.s8 %v447
          %v460 = vunpack.c.2.s8 %v448
          %v461 = vunpack.c.3.s8 %v447
          %v462 = vunpack.c.3.s8 %v448
          %v463 = vunpack.c.0.s8 %v449
          %v464 = vunpack.c.0.s8 %v450
          %v465 = vunpack.c.1.s8 %v449
          %v466 = vunpack.c.1.s8 %v450
          %v467 = vunpack.c.2.s8 %v449
          %v468 = vunpack.c.2.s8 %v450
          %v469 = vunpack.c.3.s8 %v449
          %v470 = vunpack.c.3.s8 %v450
          %v471 = vunpack.c.0.s8 %v451
          %v472 = vunpack.c.0.s8 %v452
          %v473 = vunpack.c.1.s8 %v451
          %v474 = vunpack.c.1.s8 %v452
          %v475 = vunpack.c.2.s8 %v451
          %v476 = vunpack.c.2.s8 %v452
          %v477 = vunpack.c.3.s8 %v451
          %v478 = vunpack.c.3.s8 %v452
          %v479 = vunpack.c.0.s8 %v453
          %v480 = vunpack.c.0.s8 %v454
          %v481 = vunpack.c.1.s8 %v453
          %v482 = vunpack.c.1.s8 %v454
          %v483 = vunpack.c.2.s8 %v453
          %v484 = vunpack.c.2.s8 %v454
          %v485 = vunpack.c.3.s8 %v453
          %v486 = vunpack.c.3.s8 %v454
          %v487 = vcvt.s32.f32 %v455
          %v488 = vcvt.s32.f32 %v456
          %v489 = vcvt.s32.f32 %v457
          %v490 = vcvt.s32.f32 %v458
          %v491 = vcvt.s32.f32 %v459
          %v492 = vcvt.s32.f32 %v460
          %v493 = vcvt.s32.f32 %v461
          %v494 = vcvt.s32.f32 %v462
          %v495 = vcvt.s32.f32 %v463
          %v496 = vcvt.s32.f32 %v464
          %v497 = vcvt.s32.f32 %v465
          %v498 = vcvt.s32.f32 %v466
          %v499 = vcvt.s32.f32 %v467
          %v500 = vcvt.s32.f32 %v468
          %v501 = vcvt.s32.f32 %v469
          %v502 = vcvt.s32.f32 %v470
          %v503 = vcvt.s32.f32 %v471
          %v504 = vcvt.s32.f32 %v472
          %v505 = vcvt.s32.f32 %v473
          %v506 = vcvt.s32.f32 %v474
          %v507 = vcvt.s32.f32 %v475
          %v508 = vcvt.s32.f32 %v476
          %v509 = vcvt.s32.f32 %v477
          %v510 = vcvt.s32.f32 %v478
          %v511 = vcvt.s32.f32 %v479
          %v512 = vcvt.s32.f32 %v480
          %v513 = vcvt.s32.f32 %v481
          %v514 = vcvt.s32.f32 %v482
          %v515 = vcvt.s32.f32 %v483
          %v516 = vcvt.s32.f32 %v484
          %v517 = vcvt.s32.f32 %v485
          %v518 = vcvt.s32.f32 %v486
          %s519 = scalar_lea.vmem %s286, 1
          %v520 = vld [vmem:[%s519] ss:$2 sm:$0x3]
          %v522 = vlaneseq
          %v523 = vshrl.u32 %v522, 7
          %v524 = vsub.s32 0, %v523
          %v525 = vrot.slane %v520, %v524
          %v526 = vlaneseq
          %v527 = vshrl.u32 %v526, 7
          %v528 = vsub.s32 1, %v527
          %v529 = vrot.slane %v520, %v528
          %v532 = vmul.f32 %v487, %v525
          %v533 = vmul.f32 %v488, %v529
          %v534 = vmul.f32 %v489, %v525
          %v535 = vmul.f32 %v490, %v529
          %v536 = vmul.f32 %v491, %v525
          %v537 = vmul.f32 %v492, %v529
          %v538 = vmul.f32 %v493, %v525
          %v539 = vmul.f32 %v494, %v529
          %v540 = vmul.f32 %v495, %v525
          %v541 = vmul.f32 %v496, %v529
          %v542 = vmul.f32 %v497, %v525
          %v543 = vmul.f32 %v498, %v529
          %v544 = vmul.f32 %v499, %v525
          %v545 = vmul.f32 %v500, %v529
          %v546 = vmul.f32 %v501, %v525
          %v547 = vmul.f32 %v502, %v529
          %v548 = vmul.f32 %v503, %v525
          %v549 = vmul.f32 %v504, %v529
          %v550 = vmul.f32 %v505, %v525
          %v551 = vmul.f32 %v506, %v529
          %v552 = vmul.f32 %v507, %v525
          %v553 = vmul.f32 %v508, %v529
          %v554 = vmul.f32 %v509, %v525
          %v555 = vmul.f32 %v510, %v529
          %v556 = vmul.f32 %v511, %v525
          %v557 = vmul.f32 %v512, %v529
          %v558 = vmul.f32 %v513, %v525
          %v559 = vmul.f32 %v514, %v529
          %v560 = vmul.f32 %v515, %v525
          %v561 = vmul.f32 %v516, %v529
          %v562 = vmul.f32 %v517, %v525
          %v563 = vmul.f32 %v518, %v529
          %v564 = vpack.c.bf16 %v534, %v532
          %v565 = vpack.c.bf16 %v535, %v533
          %v566 = vpack.c.bf16 %v538, %v536
          %v567 = vpack.c.bf16 %v539, %v537
          %v568 = vpack.c.bf16 %v542, %v540
          %v569 = vpack.c.bf16 %v543, %v541
          %v570 = vpack.c.bf16 %v546, %v544
          %v571 = vpack.c.bf16 %v547, %v545
          %v572 = vpack.c.bf16 %v550, %v548
          %v573 = vpack.c.bf16 %v551, %v549
          %v574 = vpack.c.bf16 %v554, %v552
          %v575 = vpack.c.bf16 %v555, %v553
          %v576 = vpack.c.bf16 %v558, %v556
          %v577 = vpack.c.bf16 %v559, %v557
          %v578 = vpack.c.bf16 %v562, %v560
          %v579 = vpack.c.bf16 %v563, %v561
          %580 = vst [vmem:[#allocation2 + $0x80] sm:$0xff] %v564
          %581 = vst [vmem:[#allocation2 + $0x88] sm:$0xff] %v565
          %582 = vst [vmem:[#allocation2 + $0x90] sm:$0xff] %v566
          %583 = vst [vmem:[#allocation2 + $0x98] sm:$0xff] %v567
          %584 = vst [vmem:[#allocation2 + $0xa0] sm:$0xff] %v568
          %585 = vst [vmem:[#allocation2 + $0xa8] sm:$0xff] %v569
          %586 = vst [vmem:[#allocation2 + $0xb0] sm:$0xff] %v570
          %587 = vst [vmem:[#allocation2 + $0xb8] sm:$0xff] %v571
          %588 = vst [vmem:[#allocation2 + $0xc0] sm:$0xff] %v572
          %589 = vst [vmem:[#allocation2 + $0xc8] sm:$0xff] %v573
          %590 = vst [vmem:[#allocation2 + $0xd0] sm:$0xff] %v574
          %591 = vst [vmem:[#allocation2 + $0xd8] sm:$0xff] %v575
          %592 = vst [vmem:[#allocation2 + $0xe0] sm:$0xff] %v576
          %593 = vst [vmem:[#allocation2 + $0xe8] sm:$0xff] %v577
          %594 = vst [vmem:[#allocation2 + $0xf0] sm:$0xff] %v578
          %595 = vst [vmem:[#allocation2 + $0xf8] sm:$0xff] %v579
        $region44: #{clinear_forward.1} parent=35 // pred_fallthru
          _
        %v596 = vld [vmem:[%s279] sm:$0xff]
        %v597 = vld [vmem:[%s279 + $0x8] sm:$0xff]
        %v598 = vld [vmem:[%s279 + $0x10] sm:$0xff]
        %v599 = vld [vmem:[%s279 + $0x18] sm:$0xff]
        %v600 = vld [vmem:[%s279 + $0x20] sm:$0xff]
        %v601 = vld [vmem:[%s279 + $0x28] sm:$0xff]
        %v602 = vld [vmem:[%s279 + $0x30] sm:$0xff]
        %v603 = vld [vmem:[%s279 + $0x38] sm:$0xff]
        %v604 = vld [vmem:[%s279 + $0x40] sm:$0xff]
        %v605 = vld [vmem:[%s279 + $0x48] sm:$0xff]
        %v606 = vld [vmem:[%s279 + $0x50] sm:$0xff]
        %v607 = vld [vmem:[%s279 + $0x58] sm:$0xff]
        %v608 = vld [vmem:[%s279 + $0x60] sm:$0xff]
        %v609 = vld [vmem:[%s279 + $0x68] sm:$0xff]
        %v610 = vld [vmem:[%s279 + $0x70] sm:$0xff]
        %v611 = vld [vmem:[%s279 + $0x78] sm:$0xff]
        %v612 = vld [vmem:[#allocation2] sm:$0xff]
        %v613 = vld [vmem:[#allocation2 + $0x8] sm:$0xff]
        %v614 = vld [vmem:[#allocation2 + $0x10] sm:$0xff]
        %v615 = vld [vmem:[#allocation2 + $0x18] sm:$0xff]
        %v616 = vld [vmem:[#allocation2 + $0x20] sm:$0xff]
        %v617 = vld [vmem:[#allocation2 + $0x28] sm:$0xff]
        %v618 = vld [vmem:[#allocation2 + $0x30] sm:$0xff]
        %v619 = vld [vmem:[#allocation2 + $0x38] sm:$0xff]
        %v620 = vld [vmem:[#allocation2 + $0x40] sm:$0xff]
        %v621 = vld [vmem:[#allocation2 + $0x48] sm:$0xff]
        %v622 = vld [vmem:[#allocation2 + $0x50] sm:$0xff]
        %v623 = vld [vmem:[#allocation2 + $0x58] sm:$0xff]
        %v624 = vld [vmem:[#allocation2 + $0x60] sm:$0xff]
        %v625 = vld [vmem:[#allocation2 + $0x68] sm:$0xff]
        %v626 = vld [vmem:[#allocation2 + $0x70] sm:$0xff]
        %v627 = vld [vmem:[#allocation2 + $0x78] sm:$0xff]
        %v628 = vld [vmem:[#allocation2 + $0x80] sm:$0xff]
        %v629 = vld [vmem:[#allocation2 + $0x88] sm:$0xff]
        %v630 = vld [vmem:[#allocation2 + $0x90] sm:$0xff]
        %v631 = vld [vmem:[#allocation2 + $0x98] sm:$0xff]
        %v632 = vld [vmem:[#allocation2 + $0xa0] sm:$0xff]
        %v633 = vld [vmem:[#allocation2 + $0xa8] sm:$0xff]
        %v634 = vld [vmem:[#allocation2 + $0xb0] sm:$0xff]
        %v635 = vld [vmem:[#allocation2 + $0xb8] sm:$0xff]
        %v636 = vld [vmem:[#allocation2 + $0xc0] sm:$0xff]
        %v637 = vld [vmem:[#allocation2 + $0xc8] sm:$0xff]
        %v638 = vld [vmem:[#allocation2 + $0xd0] sm:$0xff]
        %v639 = vld [vmem:[#allocation2 + $0xd8] sm:$0xff]
        %v640 = vld [vmem:[#allocation2 + $0xe0] sm:$0xff]
        %v641 = vld [vmem:[#allocation2 + $0xe8] sm:$0xff]
        %v642 = vld [vmem:[#allocation2 + $0xf0] sm:$0xff]
        %v643 = vld [vmem:[#allocation2 + $0xf8] sm:$0xff]
        %v644 = vld [vmem:[%s291] sm:$0x3]
        %v646 = vlaneseq
        %v647 = vshrl.u32 %v646, 7
        %v648 = vsub.s32 0, %v647
        %v649 = vrot.slane %v644, %v648
        %v650 = vlaneseq
        %v651 = vshrl.u32 %v650, 7
        %v652 = vsub.s32 1, %v651
        %v653 = vrot.slane %v644, %v652
        %v672 = vunpack.c.l.b16 %v596
        %v673 = vunpack.c.h.b16 %v596
        %v674 = vunpack.c.l.b16 %v597
        %v675 = vunpack.c.h.b16 %v597
        %v676 = vunpack.c.l.b16 %v598
        %v677 = vunpack.c.h.b16 %v598
        %v678 = vunpack.c.l.b16 %v599
        %v679 = vunpack.c.h.b16 %v599
        %v680 = vunpack.c.l.b16 %v600
        %v681 = vunpack.c.h.b16 %v600
        %v682 = vunpack.c.l.b16 %v601
        %v683 = vunpack.c.h.b16 %v601
        %v684 = vunpack.c.l.b16 %v602
        %v685 = vunpack.c.h.b16 %v602
        %v686 = vunpack.c.l.b16 %v603
        %v687 = vunpack.c.h.b16 %v603
        %v688 = vunpack.c.l.b16 %v604
        %v689 = vunpack.c.h.b16 %v604
        %v690 = vunpack.c.l.b16 %v605
        %v691 = vunpack.c.h.b16 %v605
        %v692 = vunpack.c.l.b16 %v606
        %v693 = vunpack.c.h.b16 %v606
        %v694 = vunpack.c.l.b16 %v607
        %v695 = vunpack.c.h.b16 %v607
        %v696 = vunpack.c.l.b16 %v608
        %v697 = vunpack.c.h.b16 %v608
        %v698 = vunpack.c.l.b16 %v609
        %v699 = vunpack.c.h.b16 %v609
        %v700 = vunpack.c.l.b16 %v610
        %v701 = vunpack.c.h.b16 %v610
        %v702 = vunpack.c.l.b16 %v611
        %v703 = vunpack.c.h.b16 %v611
        %v704 = vpack.c.b16 %v674, %v672
        %v705 = vpack.c.b16 %v675, %v673
        %v706 = vpack.c.b16 %v678, %v676
        %v707 = vpack.c.b16 %v679, %v677
        %v708 = vpack.c.b16 %v682, %v680
        %v709 = vpack.c.b16 %v683, %v681
        %v710 = vpack.c.b16 %v686, %v684
        %v711 = vpack.c.b16 %v687, %v685
        %v712 = vpack.c.b16 %v690, %v688
        %v713 = vpack.c.b16 %v691, %v689
        %v714 = vpack.c.b16 %v694, %v692
        %v715 = vpack.c.b16 %v695, %v693
        %v716 = vpack.c.b16 %v698, %v696
        %v717 = vpack.c.b16 %v699, %v697
        %v718 = vpack.c.b16 %v702, %v700
        %v719 = vpack.c.b16 %v703, %v701
        %736 = vmatprep.subr.bf16.mxu0 %v613
        %737 = vmatpush1.bf16.msra.mxu0 %v612
        %738 = vmatprep.subr.bf16.mxu0 %v615
        %739 = vmatpush1.bf16.msra.mxu0 %v614
        %740 = vmatprep.subr.bf16.mxu0 %v617
        %741 = vmatpush1.bf16.msra.mxu0 %v616
        %742 = vmatprep.subr.bf16.mxu0 %v619
        %743 = vmatpush1.bf16.msra.mxu0 %v618
        %744 = vmatprep.subr.bf16.mxu0 %v621
        %745 = vmatpush1.bf16.msra.mxu0 %v620
        %746 = vmatprep.subr.bf16.mxu0 %v623
        %747 = vmatpush1.bf16.msra.mxu0 %v622
        %748 = vmatprep.subr.bf16.mxu0 %v625
        %749 = vmatpush1.bf16.msra.mxu0 %v624
        %750 = vmatprep.subr.bf16.mxu0 %v627
        %751 = vmatpush1.bf16.msra.mxu0 %v626
        %752 = vmatprep.subr.bf16.mxu0 %v629
        %753 = vmatpush1.bf16.msra.mxu0 %v628
        %754 = vmatprep.subr.bf16.mxu0 %v631
        %755 = vmatpush1.bf16.msra.mxu0 %v630
        %756 = vmatprep.subr.bf16.mxu0 %v633
        %757 = vmatpush1.bf16.msra.mxu0 %v632
        %758 = vmatprep.subr.bf16.mxu0 %v635
        %759 = vmatpush1.bf16.msra.mxu0 %v634
        %760 = vmatprep.subr.bf16.mxu0 %v637
        %761 = vmatpush1.bf16.msra.mxu0 %v636
        %762 = vmatprep.subr.bf16.mxu0 %v639
        %763 = vmatpush1.bf16.msra.mxu0 %v638
        %764 = vmatprep.subr.bf16.mxu0 %v641
        %765 = vmatpush1.bf16.msra.mxu0 %v640
        %766 = vmatprep.subr.bf16.mxu0 %v643
        %767 = vmatpush1.bf16.msra.mxu0 %v642
        %768 = vmatprep.mubr.bf16.mxu0 %v705
        %769 = vmatmul.mubr.bf16.gmra.mrb[0].mxu0 %v704
        %v770 = vpop.f32.mrb[0].mxu0
        %v771 = vadd.f32 %v649, %v770
        %v772 = vpop.f32.mrb[0].mxu0
        %v773 = vadd.f32 %v653, %v772
        %v774 = vpop.f32.mrb[0].mxu0
        %v775 = vadd.f32 %v649, %v774
        %v776 = vpop.f32.mrb[0].mxu0
        %v777 = vadd.f32 %v653, %v776
        %778 = vmatprep.mubr.bf16.mxu0 %v707
        %779 = vmatmul.mubr.bf16.gmra.mrb[0].mxu0 %v706
        %v780 = vpop.f32.mrb[0].mxu0
        %v781 = vadd.f32 %v649, %v780
        %v782 = vpop.f32.mrb[0].mxu0
        %v783 = vadd.f32 %v653, %v782
        %v784 = vpop.f32.mrb[0].mxu0
        %v785 = vadd.f32 %v649, %v784
        %v786 = vpop.f32.mrb[0].mxu0
        %v787 = vadd.f32 %v653, %v786
        %788 = vmatprep.mubr.bf16.mxu0 %v709
        %789 = vmatmul.mubr.bf16.gmra.mrb[0].mxu0 %v708
        %v790 = vpop.f32.mrb[0].mxu0
        %v791 = vadd.f32 %v649, %v790
        %v792 = vpop.f32.mrb[0].mxu0
        %v793 = vadd.f32 %v653, %v792
        %v794 = vpop.f32.mrb[0].mxu0
        %v795 = vadd.f32 %v649, %v794
        %v796 = vpop.f32.mrb[0].mxu0
        %v797 = vadd.f32 %v653, %v796
        %798 = vmatprep.mubr.bf16.mxu0 %v711
        %799 = vmatmul.mubr.bf16.gmra.mrb[0].mxu0 %v710
        %v800 = vpop.f32.mrb[0].mxu0
        %v801 = vadd.f32 %v649, %v800
        %v802 = vpop.f32.mrb[0].mxu0
        %v803 = vadd.f32 %v653, %v802
        %v804 = vpop.f32.mrb[0].mxu0
        %v805 = vadd.f32 %v649, %v804
        %v806 = vpop.f32.mrb[0].mxu0
        %v807 = vadd.f32 %v653, %v806
        %808 = vmatprep.mubr.bf16.mxu0 %v713
        %809 = vmatmul.mubr.bf16.gmra.mrb[0].mxu0 %v712
        %v810 = vpop.f32.mrb[0].mxu0
        %v811 = vadd.f32 %v649, %v810
        %v812 = vpop.f32.mrb[0].mxu0
        %v813 = vadd.f32 %v653, %v812
        %v814 = vpop.f32.mrb[0].mxu0
        %v815 = vadd.f32 %v649, %v814
        %v816 = vpop.f32.mrb[0].mxu0
        %v817 = vadd.f32 %v653, %v816
        %818 = vmatprep.mubr.bf16.mxu0 %v715
        %819 = vmatmul.mubr.bf16.gmra.mrb[0].mxu0 %v714
        %v820 = vpop.f32.mrb[0].mxu0
        %v821 = vadd.f32 %v649, %v820
        %v822 = vpop.f32.mrb[0].mxu0
        %v823 = vadd.f32 %v653, %v822
        %v824 = vpop.f32.mrb[0].mxu0
        %v825 = vadd.f32 %v649, %v824
        %v826 = vpop.f32.mrb[0].mxu0
        %v827 = vadd.f32 %v653, %v826
        %828 = vmatprep.mubr.bf16.mxu0 %v717
        %829 = vmatmul.mubr.bf16.gmra.mrb[0].mxu0 %v716
        %v830 = vpop.f32.mrb[0].mxu0
        %v831 = vadd.f32 %v649, %v830
        %v832 = vpop.f32.mrb[0].mxu0
        %v833 = vadd.f32 %v653, %v832
        %v834 = vpop.f32.mrb[0].mxu0
        %v835 = vadd.f32 %v649, %v834
        %v836 = vpop.f32.mrb[0].mxu0
        %v837 = vadd.f32 %v653, %v836
        %838 = vmatprep.mubr.bf16.mxu0 %v719
        %839 = vmatmul.mubr.bf16.gmra.mrb[0].mxu0 %v718
        %v840 = vpop.f32.mrb[0].mxu0
        %v841 = vadd.f32 %v649, %v840
        %v842 = vpop.f32.mrb[0].mxu0
        %v843 = vadd.f32 %v653, %v842
        %v844 = vpop.f32.mrb[0].mxu0
        %v845 = vadd.f32 %v649, %v844
        %v846 = vpop.f32.mrb[0].mxu0
        %v847 = vadd.f32 %v653, %v846
        %848 = vdwg.mxu0
        %849 = vst [vmem:[%s273] sm:$0xff] %v771
        %850 = vst [vmem:[%s273 + $0x8] sm:$0xff] %v773
        %851 = vst [vmem:[%s273 + $0x10] sm:$0xff] %v775
        %852 = vst [vmem:[%s273 + $0x18] sm:$0xff] %v777
        %853 = vst [vmem:[%s273 + $0x20] sm:$0xff] %v781
        %854 = vst [vmem:[%s273 + $0x28] sm:$0xff] %v783
        %855 = vst [vmem:[%s273 + $0x30] sm:$0xff] %v785
        %856 = vst [vmem:[%s273 + $0x38] sm:$0xff] %v787
        %857 = vst [vmem:[%s273 + $0x40] sm:$0xff] %v791
        %858 = vst [vmem:[%s273 + $0x48] sm:$0xff] %v793
        %859 = vst [vmem:[%s273 + $0x50] sm:$0xff] %v795
        %860 = vst [vmem:[%s273 + $0x58] sm:$0xff] %v797
        %861 = vst [vmem:[%s273 + $0x60] sm:$0xff] %v801
        %862 = vst [vmem:[%s273 + $0x68] sm:$0xff] %v803
        %863 = vst [vmem:[%s273 + $0x70] sm:$0xff] %v805
        %864 = vst [vmem:[%s273 + $0x78] sm:$0xff] %v807
        %865 = vst [vmem:[%s273 + $0x80] sm:$0xff] %v811
        %866 = vst [vmem:[%s273 + $0x88] sm:$0xff] %v813
        %867 = vst [vmem:[%s273 + $0x90] sm:$0xff] %v815
        %868 = vst [vmem:[%s273 + $0x98] sm:$0xff] %v817
        %869 = vst [vmem:[%s273 + $0xa0] sm:$0xff] %v821
        %870 = vst [vmem:[%s273 + $0xa8] sm:$0xff] %v823
        %871 = vst [vmem:[%s273 + $0xb0] sm:$0xff] %v825
        %872 = vst [vmem:[%s273 + $0xb8] sm:$0xff] %v827
        %873 = vst [vmem:[%s273 + $0xc0] sm:$0xff] %v831
        %874 = vst [vmem:[%s273 + $0xc8] sm:$0xff] %v833
        %875 = vst [vmem:[%s273 + $0xd0] sm:$0xff] %v835
        %876 = vst [vmem:[%s273 + $0xd8] sm:$0xff] %v837
        %877 = vst [vmem:[%s273 + $0xe0] sm:$0xff] %v841
        %878 = vst [vmem:[%s273 + $0xe8] sm:$0xff] %v843
        %879 = vst [vmem:[%s273 + $0xf0] sm:$0xff] %v845
        %880 = vst [vmem:[%s273 + $0xf8] sm:$0xff] %v847
        %s881 = sand.u32 %s144, 1
        %s882 = sand.u32 %s144, 1
        %s883 = smul.addr %s882, 256
        %s884 = scalar_lea.vmem [#allocation5], %s883
        // Predicated region
        $region45: #{clinear_forward.1} parent=35 // pred_check
          %p885 = pneg %p154
        $region46: #{clinear_forward.1} parent=35 // pred_check_branch
          %887 = sbr.rel (%p885) target = $region48
        $region47: #{clinear_forward.1} parent=35 // pred_region
          %s888 = smul.u32 16, %s23
          %s889 = smul.u32 2, %s22
          %s890 = smul.addr %s888, 4
          %s891 = sadd.s32 %s889, %s890
          %s892 = smul.addr %s891, 8
          %s893 = scalar_lea.vmem %s4, %s892
          // Predicated region
          $region49: #{clinear_forward.1} parent=47 // pred_check
            _
          $region50: #{clinear_forward.1} parent=47 // pred_check_branch
            %895 = sbr.rel (0) target = $region52
          $region51: #{clinear_forward.1} parent=47 // pred_region
            // Predicated region
            $region53: #{clinear_forward.1} parent=51 // pred_check
              _
            $region54: #{clinear_forward.1} parent=51 // pred_check_branch
              %897 = sbr.rel (0) target = $region56
            $region55: #{clinear_forward.1} parent=51 // pred_region
              loop: start=0, step=1, limit=1
              $region57: #{clinear_forward.1} parent=55 // loop_pre_header
                _
              $region58: #{clinear_forward.1} parent=55 // loop_header
                %s899 = sphi 0, %s903
                %p900 = scmp.ge.s32.totalorder %s899, 1
                %s904 = sphi %s884, %s884
                %s905 = sphi %s893, %s893
              $region59: #{clinear_forward.1} parent=55 // loop_header_branch
                %902 = sbr.rel (%p900) target = $region63
              $region60: #{clinear_forward.1} parent=55 // loop_body
                %v906 = vld [vmem:[%s904] sm:$0xff]
                %907 = vst [vmem:[%s905] sm:$0xff] %v906
                %v908 = vld [vmem:[%s904 + $0x8] sm:$0xff]
                %909 = vst [vmem:[%s905 + $0x8] sm:$0xff] %v908
                %v910 = vld [vmem:[%s904 + $0x10] sm:$0xff]
                %911 = vst [vmem:[%s905 + $0x20] sm:$0xff] %v910
                %v912 = vld [vmem:[%s904 + $0x18] sm:$0xff]
                %913 = vst [vmem:[%s905 + $0x28] sm:$0xff] %v912
                %v914 = vld [vmem:[%s904 + $0x20] sm:$0xff]
                %915 = vst [vmem:[%s905 + $0x40] sm:$0xff] %v914
                %v916 = vld [vmem:[%s904 + $0x28] sm:$0xff]
                %917 = vst [vmem:[%s905 + $0x48] sm:$0xff] %v916
                %v918 = vld [vmem:[%s904 + $0x30] sm:$0xff]
                %919 = vst [vmem:[%s905 + $0x60] sm:$0xff] %v918
                %v920 = vld [vmem:[%s904 + $0x38] sm:$0xff]
                %921 = vst [vmem:[%s905 + $0x68] sm:$0xff] %v920
                %v922 = vld [vmem:[%s904 + $0x40] sm:$0xff]
                %923 = vst [vmem:[%s905 + $0x80] sm:$0xff] %v922
                %v924 = vld [vmem:[%s904 + $0x48] sm:$0xff]
                %925 = vst [vmem:[%s905 + $0x88] sm:$0xff] %v924
                %v926 = vld [vmem:[%s904 + $0x50] sm:$0xff]
                %927 = vst [vmem:[%s905 + $0xa0] sm:$0xff] %v926
                %v928 = vld [vmem:[%s904 + $0x58] sm:$0xff]
                %929 = vst [vmem:[%s905 + $0xa8] sm:$0xff] %v928
                %v930 = vld [vmem:[%s904 + $0x60] sm:$0xff]
                %931 = vst [vmem:[%s905 + $0xc0] sm:$0xff] %v930
                %v932 = vld [vmem:[%s904 + $0x68] sm:$0xff]
                %933 = vst [vmem:[%s905 + $0xc8] sm:$0xff] %v932
                %v934 = vld [vmem:[%s904 + $0x70] sm:$0xff]
                %935 = vst [vmem:[%s905 + $0xe0] sm:$0xff] %v934
                %v936 = vld [vmem:[%s904 + $0x78] sm:$0xff]
                %937 = vst [vmem:[%s905 + $0xe8] sm:$0xff] %v936
                %v938 = vld [vmem:[%s904 + $0x80] sm:$0xff]
                %939 = vst [vmem:[%s905 + $0x100] sm:$0xff] %v938
                %v940 = vld [vmem:[%s904 + $0x88] sm:$0xff]
                %941 = vst [vmem:[%s905 + $0x108] sm:$0xff] %v940
                %v942 = vld [vmem:[%s904 + $0x90] sm:$0xff]
                %943 = vst [vmem:[%s905 + $0x120] sm:$0xff] %v942
                %v944 = vld [vmem:[%s904 + $0x98] sm:$0xff]
                %945 = vst [vmem:[%s905 + $0x128] sm:$0xff] %v944
                %v946 = vld [vmem:[%s904 + $0xa0] sm:$0xff]
                %947 = vst [vmem:[%s905 + $0x140] sm:$0xff] %v946
                %v948 = vld [vmem:[%s904 + $0xa8] sm:$0xff]
                %949 = vst [vmem:[%s905 + $0x148] sm:$0xff] %v948
                %v950 = vld [vmem:[%s904 + $0xb0] sm:$0xff]
                %951 = vst [vmem:[%s905 + $0x160] sm:$0xff] %v950
                %v952 = vld [vmem:[%s904 + $0xb8] sm:$0xff]
                %953 = vst [vmem:[%s905 + $0x168] sm:$0xff] %v952
                %v954 = vld [vmem:[%s904 + $0xc0] sm:$0xff]
                %955 = vst [vmem:[%s905 + $0x180] sm:$0xff] %v954
                %v956 = vld [vmem:[%s904 + $0xc8] sm:$0xff]
                %957 = vst [vmem:[%s905 + $0x188] sm:$0xff] %v956
                %v958 = vld [vmem:[%s904 + $0xd0] sm:$0xff]
                %959 = vst [vmem:[%s905 + $0x1a0] sm:$0xff] %v958
                %v960 = vld [vmem:[%s904 + $0xd8] sm:$0xff]
                %961 = vst [vmem:[%s905 + $0x1a8] sm:$0xff] %v960
                %v962 = vld [vmem:[%s904 + $0xe0] sm:$0xff]
                %963 = vst [vmem:[%s905 + $0x1c0] sm:$0xff] %v962
                %v964 = vld [vmem:[%s904 + $0xe8] sm:$0xff]
                %965 = vst [vmem:[%s905 + $0x1c8] sm:$0xff] %v964
                %v966 = vld [vmem:[%s904 + $0xf0] sm:$0xff]
                %967 = vst [vmem:[%s905 + $0x1e0] sm:$0xff] %v966
                %v968 = vld [vmem:[%s904 + $0xf8] sm:$0xff]
                %969 = vst [vmem:[%s905 + $0x1e8] sm:$0xff] %v968
              $region61: #{clinear_forward.1} parent=55 // loop_footer
                %s903 = sadd.s32 1, %s899
              $region62: #{clinear_forward.1} parent=55 // loop_footer_branch
                %898 = sbr.rel target = $region58
              $region63: #{clinear_forward.1} parent=55 // loop_exit
                _
            $region56: #{clinear_forward.1} parent=51 // pred_fallthru
              _
            // Predicated region
            $region64: #{clinear_forward.1} parent=51 // pred_check
              _
            $region65: #{clinear_forward.1} parent=51 // pred_check_branch
              %971 = sbr.rel target = $region67
            $region66: #{clinear_forward.1} parent=51 // pred_region
              _
            $region67: #{clinear_forward.1} parent=51 // pred_fallthru
              _
          $region52: #{clinear_forward.1} parent=47 // pred_fallthru
            _
          %972 = vnop
        $region48: #{clinear_forward.1} parent=35 // pred_fallthru
          _
      $region36: #{clinear_forward.1} parent=5 // pred_fallthru
        _
      %p973 = scmp.le.s32.totalorder 2, %s13
      // Predicated region
      $region68: #{clinear_forward.1} parent=5 // pred_check
        %p974 = pneg %p973
      $region69: #{clinear_forward.1} parent=5 // pred_check_branch
        %976 = sbr.rel (%p974) target = $region71
      $region70: #{clinear_forward.1} parent=5 // pred_region
        %s977 = ssub.s32 %s13, 2
        // Predicated region
        $region72: #{clinear_forward.1} parent=70 // pred_check
          %p978 = pneg %p160
        $region73: #{clinear_forward.1} parent=70 // pred_check_branch
          %980 = sbr.rel (%p978) target = $region75
        $region74: #{clinear_forward.1} parent=70 // pred_region
          %s981 = sand.u32 %s145, 1
          %s982 = sand.u32 %s145, 1
          %s983 = smul.addr %s982, 256
          %s984 = scalar_lea.vmem [#allocation5], %s983
        $region75: #{clinear_forward.1} parent=70 // pred_fallthru
          _
      $region71: #{clinear_forward.1} parent=5 // pred_fallthru
        _
    $region6: #{clinear_forward.1} parent=1 // loop_footer
      %s17 = sadd.s32 1, %s13
    $region7: #{clinear_forward.1} parent=1 // loop_footer_branch
      %12 = sbr.rel target = $region3
    $region8: #{clinear_forward.1} parent=1 // loop_exit
      _
    %985 = vsyncpa [#allocation4], 1
    %s986 = scalar_lea.sflag [#allocation4], 1
    %987 = vsyncpa %s986, 1

</llo_original>
